<compile_context>
chip_gen: v6e
topology: v6e:2x2x1
jax: 0.10.0
libtpu: 0.0.40
codegen_flags: <defaults>
</compile_context>

<pallas_src>
import functools

import jax
import jax.numpy as jnp
from jax.experimental import pallas as pl
from jax.experimental.pallas import tpu as pltpu


def _round_up(x, m):
    return (x + m - 1) // m * m


# ----------------------------------------------------------------------------
# Pallas kernel: conv1 -> ReLU -> conv2' -> ReLU -> per-batch running N-sum
# ----------------------------------------------------------------------------
def _obsbran_kernel(x_ref, w1_ref, b1_ref, w2_ref, b2_ref, out_ref, *, n_valid):
    n = pl.program_id(1)

    @pl.when(n == 0)
    def _init():
        out_ref[...] = jnp.zeros_like(out_ref)

    x = x_ref[...]                                    # (TN, Dp) bf16
    tn = x.shape[0]

    # conv1 (1x1) on the MXU (tiny K, but the MXU is otherwise idle here);
    # bias + ReLU epilogue in f32.
    z1 = jnp.dot(x, w1_ref[...], preferred_element_type=jnp.float32)
    h1 = jnp.maximum(z1 + b1_ref[...], 0.0)           # (TN, d0) f32

    # conv2 with bn1 pre-folded into its weights/bias; bf16 MXU, f32 acc.
    z2 = jnp.dot(h1.astype(jnp.bfloat16), w2_ref[...],
                 preferred_element_type=jnp.float32)
    h2 = jnp.maximum(z2 + b2_ref[...], 0.0)           # (TN, d1) f32

    if n_valid is not None:
        # N was padded: zero the padded rows' (bias-driven, nonzero) output
        # before accumulating.  Only emitted when padding actually exists.
        row = n * tn + jax.lax.broadcasted_iota(jnp.int32, (tn, 1), 0)
        h2 = jnp.where(row < n_valid, h2, 0.0)

    # Per-sublane partial sums: pure element-wise vreg adds (VALU).  The 8->1
    # cross-sublane reduce is deferred to XLA after the kernel, so there is no
    # per-step XLU reduce or sublane-masked read-modify-write.
    d1 = h2.shape[1]
    out_ref[...] += jnp.sum(h2.reshape(tn // 8, 8, d1), axis=0)


# ----------------------------------------------------------------------------
# Parameter construction (deterministic, mirrors the PyTorch __init__ shapes)
# ----------------------------------------------------------------------------
def init_params(key, channel, dims):
    d0, d1, d2 = dims
    keys = jax.random.split(key, 22)
    eps = 1e-5

    def lin(kw, kb, fan_in, fan_out):
        # weights stored as (in, out) so the kernel does x @ W
        w = jax.random.normal(kw, (fan_in, fan_out), jnp.float32) * 0.05
        b = jax.random.normal(kb, (1, fan_out), jnp.float32) * 0.05
        return w, b

    def bn(kg, kb, km, kv, c):
        gamma = 1.0 + 0.1 * jax.random.normal(kg, (1, c), jnp.float32)
        beta = 0.1 * jax.random.normal(kb, (1, c), jnp.float32)
        r_mean = 0.1 * jax.random.normal(km, (1, c), jnp.float32)
        r_var = jnp.abs(1.0 + 0.1 * jax.random.normal(kv, (1, c), jnp.float32))
        scale = gamma / jnp.sqrt(r_var + eps)
        shift = beta - r_mean * scale
        return scale, shift

    w1, b1 = lin(keys[0], keys[1], channel, d0)
    w2, b2 = lin(keys[2], keys[3], d0, d1)
    w3, b3 = lin(keys[4], keys[5], d1, d2)
    s1, t1 = bn(keys[6], keys[7], keys[8], keys[9], d0)
    s2, t2 = bn(keys[10], keys[11], keys[12], keys[13], d1)
    s3, t3 = bn(keys[14], keys[15], keys[16], keys[17], d2)
    wf1, bf1 = lin(keys[18], keys[19], d2, d2)
    wf2, bf2 = lin(keys[20], keys[21], d2, d2)

    return (w1, b1, s1, t1, w2, b2, s2, t2, w3, b3, s3, t3, wf1, bf1, wf2, bf2)


def _choose_row_tile(n):
    """Pick a large row tile (multiple of 8); pad N rather than shrinking it."""
    target = 2048
    if n <= target:
        tn = _round_up(max(n, 1), 8)
        return tn, tn                                 # single tile covers N
    for tn in (2048, 1024, 512, 256):
        if n % tn == 0:
            return tn, n
    return target, _round_up(n, target)               # pad + in-kernel mask


# ----------------------------------------------------------------------------
# Wrapper: BN folds, padding/casting, pallas_call, post-pool head in XLA
# ----------------------------------------------------------------------------
def obsbran_forward(x, params, *, row_tile=None):
    (w1, b1, s1, t1, w2, b2, s2, t2,
     w3, b3, s3, t3, wf1, bf1, wf2, bf2) = params
    B, N, D = x.shape
    d1 = w2.shape[1]

    # ---- BN folds (exact, eval mode) ---------------------------------------
    # bn1 folded into conv2:  relu(z1)*s1 + t1  ->  relu(z1) @ W2' + b2'
    w2f = s1.reshape(-1, 1) * w2                       # (d0, d1)
    b2f = t1 @ w2 + b2                                 # (1, d1)
    # bn2 + conv3 + bn3 folded into one post-pool affine map.
    w3s = w3 * s3                                      # (d1, d2)
    w3f = s2.reshape(-1, 1) * w3s                      # (d1, d2)
    shift3 = jnp.float32(N) * (t2 @ w3s + b3 * s3 + t3)    # (1, d2)

    # ---- tiling & padding ---------------------------------------------------
    if row_tile is not None:
        tn = row_tile
        n_pad = _round_up(N, tn)
    else:
        tn, n_pad = _choose_row_tile(N)
    assert tn % 8 == 0, tn
    num_n = n_pad // tn
    d_pad = _round_up(max(D, 8), 8)                    # K-dim pad (4 -> 8)
    n_valid = N if n_pad != N else None

    xp = x.astype(jnp.float32)
    if n_pad != N or d_pad != D:
        xp = jnp.pad(xp, ((0, 0), (0, n_pad - N), (0, d_pad - D)))
    x_bf = xp.astype(jnp.bfloat16)                     # halves the x DMA

    w1p = w1 if d_pad == D else jnp.pad(w1, ((0, d_pad - D), (0, 0)))
    w1_bf = w1p.astype(jnp.bfloat16)                   # pre-cast: no per-step
    w2_bf = w2f.astype(jnp.bfloat16)                   # in-kernel weight casts

    weights = (w1_bf, b1, w2_bf, b2f)

    def wspec(arr):
        # Full-array block, constant index_map -> DMA'd once, stays resident.
        return pl.BlockSpec(arr.shape, lambda b, n: (0,) * arr.ndim)

    grid_spec = pltpu.PrefetchScalarGridSpec(
        num_scalar_prefetch=0,
        grid=(B, num_n),                               # reduction axis last
        in_specs=[pl.BlockSpec((None, tn, d_pad), lambda b, n: (b, n, 0))]
                 + [wspec(w) for w in weights],
        out_specs=pl.BlockSpec((None, 8, d1), lambda b, n: (b, 0, 0)),
    )

    acc8 = pl.pallas_call(
        functools.partial(_obsbran_kernel, n_valid=n_valid),
        out_shape=jax.ShapeDtypeStruct((B, 8, d1), jnp.float32),
        grid_spec=grid_spec,
        compiler_params=pltpu.CompilerParams(
            dimension_semantics=("parallel", "arbitrary")),
    )(x_bf, *weights)

    # ---- post-pool affine + FC head as ordinary batched XLA matmuls ---------
    pooled = acc8.sum(axis=1)                          # (B, d1): 8->1 reduce
    h3 = pooled @ w3f + shift3                         # folded bn2/conv3/bn3
    f1 = jnp.maximum(h3 @ wf1 + bf1, 0.0)              # fc1 + ReLU (Dropout=id)
    return f1 @ wf2 + bf2                              # fc2


# ----------------------------------------------------------------------------
# Pure-JAX f32 reference (same eval-mode semantics) for a correctness check
# ----------------------------------------------------------------------------
def obsbran_reference(x, params):
    (w1, b1, s1, t1, w2, b2, s2, t2,
     w3, b3, s3, t3, wf1, bf1, wf2, bf2) = params
    B, N, D = x.shape
    h = x.reshape(B * N, D).astype(jnp.float32)
    h = jnp.maximum(h @ w1 + b1, 0.0) * s1 + t1
    h = jnp.maximum(h @ w2 + b2, 0.0) * s2 + t2
    h = (h @ w3 + b3) * s3 + t3
    pooled = h.reshape(B, N, -1).sum(axis=1)
    f = jnp.maximum(pooled @ wf1 + bf1, 0.0)
    return f @ wf2 + bf2


if __name__ == "__main__":
    # Small shapes consistent with the module: x is (B, N, D) with D == channel.
    B, N, channel = 2, 8, 4
    dims = [128, 256, 256]

    key = jax.random.PRNGKey(0)
    k_x, k_p = jax.random.split(key)
    x = jax.random.normal(k_x, (B, N, channel), jnp.float32)
    params = init_params(k_p, channel, dims)

    out = jax.block_until_ready(obsbran_forward(x, params))
    ref = obsbran_reference(x, params)

    assert out.shape == (B, dims[2]), out.shape
    # conv1/conv2 run in bf16 on the MXU (f32 accumulation, f32 epilogues):
    # compare against the f32 reference with a bf16-appropriate tolerance.
    assert jnp.allclose(out, ref, atol=5e-2, rtol=5e-2), (
        float(jnp.max(jnp.abs(out - ref)))
    )
    print("KERNEL_OK")
</pallas_src>

<mosaic_0001>
module attributes {stable_mosaic.version = 11 : i64} {
  func.func @_obsbran_kernel(%arg0: i32, %arg1: i32, %arg2: memref<1x8x8xbf16, #tpu.memory_space<vmem>>, %arg3: memref<8x128xbf16, #tpu.memory_space<vmem>>, %arg4: memref<1x128xf32, #tpu.memory_space<vmem>>, %arg5: memref<128x256xbf16, #tpu.memory_space<vmem>>, %arg6: memref<1x256xf32, #tpu.memory_space<vmem>>, %arg7: memref<1x8x256xf32, #tpu.memory_space<vmem>>) attributes {dimension_semantics = [#tpu.dimension_semantics<parallel>, #tpu.dimension_semantics<arbitrary>], iteration_bounds = array<i64: 2, 1>, scalar_prefetch = 0 : i64, scratch_operands = 0 : i64, tpu.core_type = #tpu.core_type<tc>, window_params = [{transform_indices = @transform_0, window_bounds = array<i64: 1, 8, 8>}, {pipeline_mode = #tpu.pipeline_mode<synchronous>, transform_indices = @transform_1, window_bounds = array<i64: 8, 128>}, {pipeline_mode = #tpu.pipeline_mode<synchronous>, transform_indices = @transform_2, window_bounds = array<i64: 1, 128>}, {pipeline_mode = #tpu.pipeline_mode<synchronous>, transform_indices = @transform_3, window_bounds = array<i64: 128, 256>}, {pipeline_mode = #tpu.pipeline_mode<synchronous>, transform_indices = @transform_4, window_bounds = array<i64: 1, 256>}, {transform_indices = @transform_5, window_bounds = array<i64: 1, 8, 256>}]} {
    %c0_i32 = arith.constant 0 : i32
    %0 = arith.cmpi eq, %arg1, %c0_i32 : i32
    %1 = arith.extui %0 : i1 to i32
    %c0_i32_0 = arith.constant 0 : i32
    %2 = arith.cmpi ne, %1, %c0_i32_0 : i32
    scf.if %2 {
      %cst_21 = arith.constant 0.000000e+00 : f32
      %28 = vector.broadcast %cst_21 : f32 to vector<8x256xf32>
      %c0_22 = arith.constant 0 : index
      %c0_23 = arith.constant 0 : index
      %c0_24 = arith.constant 0 : index
      %29 = vector.load %arg7[%c0_22, %c0_23, %c0_24] : memref<1x8x256xf32, #tpu.memory_space<vmem>>, vector<1x8x256xf32>
      %30 = vector.shape_cast %29 : vector<1x8x256xf32> to vector<8x256xf32>
      %31 = vector.shape_cast %28 : vector<8x256xf32> to vector<1x8x256xf32>
      tpu.vector_store %arg7[%c0_22, %c0_23, %c0_24], %31 {strides = array<i32>} : memref<1x8x256xf32, #tpu.memory_space<vmem>>, vector<1x8x256xf32>,
    } else {
    }
    %c0 = arith.constant 0 : index
    %c0_1 = arith.constant 0 : index
    %c0_2 = arith.constant 0 : index
    %3 = vector.load %arg2[%c0, %c0_1, %c0_2] : memref<1x8x8xbf16, #tpu.memory_space<vmem>>, vector<1x8x8xbf16>
    %4 = vector.shape_cast %3 : vector<1x8x8xbf16> to vector<8x8xbf16>
    %c0_3 = arith.constant 0 : index
    %c0_4 = arith.constant 0 : index
    %5 = vector.load %arg3[%c0_3, %c0_4] : memref<8x128xbf16, #tpu.memory_space<vmem>>, vector<8x128xbf16>
    %cst = arith.constant dense<0.000000e+00> : vector<8x128xf32>
    %6 = tpu.matmul %4, %5, %cst {dimension_numbers = #tpu.dot_dimension_numbers<[1], [0], [0], [1], [0, 0, 1, 1], [], []>} : vector<8x8xbf16>, vector<8x128xbf16>, vector<8x128xf32> -> vector<8x128xf32>
    %c0_5 = arith.constant 0 : index
    %c0_6 = arith.constant 0 : index
    %7 = vector.load %arg4[%c0_5, %c0_6] : memref<1x128xf32, #tpu.memory_space<vmem>>, vector<1x128xf32>
    %8 = vector.broadcast %7 : vector<1x128xf32> to vector<8x128xf32>
    %9 = arith.addf %6, %8 : vector<8x128xf32>
    %cst_7 = arith.constant 0.000000e+00 : f32
    %10 = vector.broadcast %cst_7 : f32 to vector<8x128xf32>
    %11 = arith.maximumf %9, %10 : vector<8x128xf32>
    %12 = arith.truncf %11 : vector<8x128xf32> to vector<8x128xbf16>
    %c0_8 = arith.constant 0 : index
    %c0_9 = arith.constant 0 : index
    %13 = vector.load %arg5[%c0_8, %c0_9] : memref<128x256xbf16, #tpu.memory_space<vmem>>, vector<128x256xbf16>
    %cst_10 = arith.constant dense<0.000000e+00> : vector<8x256xf32>
    %14 = tpu.matmul %12, %13, %cst_10 {dimension_numbers = #tpu.dot_dimension_numbers<[1], [0], [0], [1], [0, 0, 1, 1], [], []>} : vector<8x128xbf16>, vector<128x256xbf16>, vector<8x256xf32> -> vector<8x256xf32>
    %c0_11 = arith.constant 0 : index
    %c0_12 = arith.constant 0 : index
    %15 = vector.load %arg6[%c0_11, %c0_12] : memref<1x256xf32, #tpu.memory_space<vmem>>, vector<1x256xf32>
    %16 = vector.broadcast %15 : vector<1x256xf32> to vector<8x256xf32>
    %17 = arith.addf %14, %16 : vector<8x256xf32>
    %cst_13 = arith.constant 0.000000e+00 : f32
    %18 = vector.broadcast %cst_13 : f32 to vector<8x256xf32>
    %19 = arith.maximumf %17, %18 : vector<8x256xf32>
    %c0_14 = arith.constant 0 : index
    %c0_15 = arith.constant 0 : index
    %c0_16 = arith.constant 0 : index
    %20 = vector.load %arg7[%c0_14, %c0_15, %c0_16] : memref<1x8x256xf32, #tpu.memory_space<vmem>>, vector<1x8x256xf32>
    %21 = vector.shape_cast %20 : vector<1x8x256xf32> to vector<8x256xf32>
    %22 = vector.shape_cast %19 : vector<8x256xf32> to vector<1x8x256xf32>
    %cst_17 = arith.constant dense<0.000000e+00> : vector<8x256xf32>
    %23 = vector.multi_reduction <add>, %22, %cst_17 [0] : vector<1x8x256xf32> to vector<8x256xf32>
    %24 = arith.addf %21, %23 : vector<8x256xf32>
    %c0_18 = arith.constant 0 : index
    %c0_19 = arith.constant 0 : index
    %c0_20 = arith.constant 0 : index
    %25 = vector.load %arg7[%c0_18, %c0_19, %c0_20] : memref<1x8x256xf32, #tpu.memory_space<vmem>>, vector<1x8x256xf32>
    %26 = vector.shape_cast %25 : vector<1x8x256xf32> to vector<8x256xf32>
    %27 = vector.shape_cast %24 : vector<8x256xf32> to vector<1x8x256xf32>
    tpu.vector_store %arg7[%c0_18, %c0_19, %c0_20], %27 {strides = array<i32>} : memref<1x8x256xf32, #tpu.memory_space<vmem>>, vector<1x8x256xf32>,
    return
  }
  func.func @transform_0(%arg0: i32, %arg1: i32) -> (i32, i32, i32) {
    %c0_i32 = arith.constant 0 : i32
    %c0_i32_0 = arith.constant 0 : i32
    return %arg0, %arg1, %c0_i32 : i32, i32, i32
  }
  func.func @transform_1(%arg0: i32, %arg1: i32) -> (i32, i32) {
    %c0_i32 = arith.constant 0 : i32
    %c0_i32_0 = arith.constant 0 : i32
    %c0_i32_1 = arith.constant 0 : i32
    return %c0_i32, %c0_i32_0 : i32, i32
  }
  func.func @transform_2(%arg0: i32, %arg1: i32) -> (i32, i32) {
    %c0_i32 = arith.constant 0 : i32
    %c0_i32_0 = arith.constant 0 : i32
    %c0_i32_1 = arith.constant 0 : i32
    return %c0_i32, %c0_i32_0 : i32, i32
  }
  func.func @transform_3(%arg0: i32, %arg1: i32) -> (i32, i32) {
    %c0_i32 = arith.constant 0 : i32
    %c0_i32_0 = arith.constant 0 : i32
    %c0_i32_1 = arith.constant 0 : i32
    return %c0_i32, %c0_i32_0 : i32, i32
  }
  func.func @transform_4(%arg0: i32, %arg1: i32) -> (i32, i32) {
    %c0_i32 = arith.constant 0 : i32
    %c0_i32_0 = arith.constant 0 : i32
    %c0_i32_1 = arith.constant 0 : i32
    return %c0_i32, %c0_i32_0 : i32, i32
  }
  func.func @transform_5(%arg0: i32, %arg1: i32) -> (i32, i32, i32) {
    %c0_i32 = arith.constant 0 : i32
    %c0_i32_0 = arith.constant 0 : i32
    %c0_i32_1 = arith.constant 0 : i32
    return %arg0, %c0_i32, %c0_i32_0 : i32, i32, i32
  }
}

</mosaic_0001>

<llo_original>
// kernel: tpu_custom_call.1
$region0: #{tpu_custom_call.1}
  #allocation0 [shape = 'u32[]', space=smem, size = 0x4, offset = 0x4, fixed_abs, tag = 'smem constant byte address 0x4 - core index']
  #allocation1 [shape = 'u32[144,128]{1,0:T(1,128)}', space=vmem, size = 0x12000, scoped, tag = 'internal scratch']
  %s0 = inlined_call_operand.hbm [shape: bf16[2,8,8], index: 0, kind: input, shape index: {}]
  %s1 = inlined_call_operand.hbm [shape: bf16[8,128], index: 1, kind: input, shape index: {}]
  %s2 = inlined_call_operand.vmem [shape: f32[1,128], index: 2, kind: input, shape index: {}]
  %s3 = inlined_call_operand.hbm [shape: bf16[128,256], index: 3, kind: input, shape index: {}]
  %s4 = inlined_call_operand.vmem [shape: f32[1,256], index: 4, kind: input, shape index: {}]
  %s5 = inlined_call_operand.hbm [shape: f32[2,8,256], index: 5, kind: output, shape index: {}]
  %s6 = sld [smem:[#allocation0]]
  $region69: #{tpu_custom_call.1} parent=0
    _
  %s8 = ssub.s32 1, %s6
  %s9 = scalar_select 0, %s8, %s6
  $region1: #{tpu_custom_call.1} parent=0
    #allocation2 [shape = 'u8[4096]{0}', space=vmem, size = 0x1000, scoped, tag = 'input window, operand 0']
    #allocation3 [shape = 's32[2]{0}', space=sflag, size = 0x8, scoped, tag = 'scoped memory for tpu_custom_call.1']
    #allocation4 [shape = 's32[2]{0}', space=sflag, size = 0x8, scoped, tag = 'scoped memory for tpu_custom_call.1']
    #allocation5 [shape = 'u8[2048]{0}', space=vmem, size = 0x800, scoped, tag = 'input window, operand 1, single buffered']
    #allocation6 [shape = 's32[1]{0}', space=sflag, size = 0x4, scoped, tag = 'scoped memory for tpu_custom_call.1']
    #allocation7 [shape = 'u8[65536]{0}', space=vmem, size = 0x10000, scoped, tag = 'input window, operand 3, single buffered']
    #allocation8 [shape = 'u8[16384]{0}', space=vmem, size = 0x4000, scoped, tag = 'output window, operand 0']
    %10 = vsyncpa [#allocation3], 0
    %s11 = scalar_lea.sflag [#allocation3], 1
    %12 = vsyncpa %s11, 0
    %13 = vsyncpa [#allocation6], 0
    %14 = vsyncpa [#allocation4], 0
    %s15 = scalar_lea.sflag [#allocation4], 1
    %16 = vsyncpa %s15, 0
    loop: start=0, step=1, limit=4
    $region2: #{tpu_custom_call.1} parent=1 // loop_pre_header
      _
    $region3: #{tpu_custom_call.1} parent=1 // loop_header
      %s18 = sphi 0, %s22
      %p19 = scmp.ge.s32.totalorder %s18, 4
      %s25 = sphi 0, %s37
      %s26 = sphi 0, %s33
      %s27 = sphi 0, %s25
      %s28 = sphi 0, %s26
      %s29 = sphi 0, %s27
      %s30 = sphi 0, %s28
      %s42 = sphi 0, %s44
      %s45 = sphi 0, %s42
      %s46 = sphi 0, %s45
      %s62 = sphi 0, %s46
      %s66 = sphi 0, %s66
      %s68 = sphi 0, %s66
      %s69 = sphi 0, %s68
      %s83 = sphi 0, %s69
      %s87 = sphi 0, %s87
      %s89 = sphi 0, %s87
      %s90 = sphi 0, %s89
      %s104 = sphi 0, %s90
      %s108 = sphi 0, %s108
      %s110 = sphi 0, %s108
      %s111 = sphi 0, %s110
      %s125 = sphi 0, %s111
      %s129 = sphi 0, %s129
      %s131 = sphi 0, %s129
      %s132 = sphi 0, %s131
      %s146 = sphi 0, %s132
      %s152 = sphi 0, %s154
      %s155 = sphi 0, %s152
      %s156 = sphi 0, %s155
      %s172 = sphi 0, %s156
    $region4: #{tpu_custom_call.1} parent=1 // loop_header_branch
      %21 = sbr.rel (%p19) target = $region8
    $region5: #{tpu_custom_call.1} parent=1 // loop_body
      %s23 = ssub.s32 %s18, 1
      %s24 = ssub.s32 %s18, 2
      %s31 = sadd.s32 1, %s26
      %p32 = scmp.ge.s32.totalorder %s31, 1
      %s33 = scalar_select %p32, 0, %s31
      %s34 = sadd.s32 1, %s25
      %s35 = scalar_select %p32, %s34, %s25
      %p36 = scmp.ge.s32.totalorder %s35, 2
      %s37 = scalar_select %p36, 0, %s35
      %s38 = ssub.s32 %s25, %s37
      %s39 = ssub.s32 %s26, %s33
      %s40 = sor.u32 %s38, %s39
      %p41 = scmp.eq.s32.totalorder %s40, 0
      %s43 = sadd.s32 %s42, 1
      %s44 = scalar_select %p41, %s42, %s43
      %p47 = pneg %p41
      %p48 = scmp.eq.s32.totalorder %s18, 1
      %p49 = por %p47, %p48
      %p50 = scmp.ne.s32.totalorder %s42, %s45
      %p51 = scmp.eq.s32.totalorder %s18, 0
      %p52 = por %p50, %p51
      %p53 = scmp.ne.s32.totalorder %s42, %s45
      %p54 = scmp.eq.s32.totalorder %s23, 1
      %p55 = por %p53, %p54
      %p56 = scmp.ne.s32.totalorder %s45, %s46
      %p57 = scmp.eq.s32.totalorder %s23, 0
      %p58 = por %p56, %p57
      %p59 = scmp.ne.s32.totalorder %s45, %s46
      %p60 = scmp.eq.s32.totalorder %s24, 1
      %p61 = por %p59, %p60
      %p63 = scmp.ne.s32.totalorder %s46, %s62
      %p64 = scmp.eq.s32.totalorder %s24, 0
      %p65 = por %p63, %p64
      %s67 = sadd.s32 %s66, 1
      %p70 = scmp.eq.s32.totalorder %s18, 1
      %p71 = scmp.ne.s32.totalorder %s66, %s68
      %p72 = scmp.eq.s32.totalorder %s18, 0
      %p73 = por %p71, %p72
      %p74 = scmp.ne.s32.totalorder %s66, %s68
      %p75 = scmp.eq.s32.totalorder %s23, 1
      %p76 = por %p74, %p75
      %p77 = scmp.ne.s32.totalorder %s68, %s69
      %p78 = scmp.eq.s32.totalorder %s23, 0
      %p79 = por %p77, %p78
      %p80 = scmp.ne.s32.totalorder %s68, %s69
      %p81 = scmp.eq.s32.totalorder %s24, 1
      %p82 = por %p80, %p81
      %p84 = scmp.ne.s32.totalorder %s69, %s83
      %p85 = scmp.eq.s32.totalorder %s24, 0
      %p86 = por %p84, %p85
      %s88 = sadd.s32 %s87, 1
      %p91 = scmp.eq.s32.totalorder %s18, 1
      %p92 = scmp.ne.s32.totalorder %s87, %s89
      %p93 = scmp.eq.s32.totalorder %s18, 0
      %p94 = por %p92, %p93
      %p95 = scmp.ne.s32.totalorder %s87, %s89
      %p96 = scmp.eq.s32.totalorder %s23, 1
      %p97 = por %p95, %p96
      %p98 = scmp.ne.s32.totalorder %s89, %s90
      %p99 = scmp.eq.s32.totalorder %s23, 0
      %p100 = por %p98, %p99
      %p101 = scmp.ne.s32.totalorder %s89, %s90
      %p102 = scmp.eq.s32.totalorder %s24, 1
      %p103 = por %p101, %p102
      %p105 = scmp.ne.s32.totalorder %s90, %s104
      %p106 = scmp.eq.s32.totalorder %s24, 0
      %p107 = por %p105, %p106
      %s109 = sadd.s32 %s108, 1
      %p112 = scmp.eq.s32.totalorder %s18, 1
      %p113 = scmp.ne.s32.totalorder %s108, %s110
      %p114 = scmp.eq.s32.totalorder %s18, 0
      %p115 = por %p113, %p114
      %p116 = scmp.ne.s32.totalorder %s108, %s110
      %p117 = scmp.eq.s32.totalorder %s23, 1
      %p118 = por %p116, %p117
      %p119 = scmp.ne.s32.totalorder %s110, %s111
      %p120 = scmp.eq.s32.totalorder %s23, 0
      %p121 = por %p119, %p120
      %p122 = scmp.ne.s32.totalorder %s110, %s111
      %p123 = scmp.eq.s32.totalorder %s24, 1
      %p124 = por %p122, %p123
      %p126 = scmp.ne.s32.totalorder %s111, %s125
      %p127 = scmp.eq.s32.totalorder %s24, 0
      %p128 = por %p126, %p127
      %s130 = sadd.s32 %s129, 1
      %p133 = scmp.eq.s32.totalorder %s18, 1
      %p134 = scmp.ne.s32.totalorder %s129, %s131
      %p135 = scmp.eq.s32.totalorder %s18, 0
      %p136 = por %p134, %p135
      %p137 = scmp.ne.s32.totalorder %s129, %s131
      %p138 = scmp.eq.s32.totalorder %s23, 1
      %p139 = por %p137, %p138
      %p140 = scmp.ne.s32.totalorder %s131, %s132
      %p141 = scmp.eq.s32.totalorder %s23, 0
      %p142 = por %p140, %p141
      %p143 = scmp.ne.s32.totalorder %s131, %s132
      %p144 = scmp.eq.s32.totalorder %s24, 1
      %p145 = por %p143, %p144
      %p147 = scmp.ne.s32.totalorder %s132, %s146
      %p148 = scmp.eq.s32.totalorder %s24, 0
      %p149 = por %p147, %p148
      %s150 = ssub.s32 %s25, %s37
      %p151 = scmp.eq.s32.totalorder %s150, 0
      %s153 = sadd.s32 %s152, 1
      %s154 = scalar_select %p151, %s152, %s153
      %p157 = pneg %p151
      %p158 = scmp.eq.s32.totalorder %s18, 1
      %p159 = por %p157, %p158
      %p160 = scmp.ne.s32.totalorder %s152, %s155
      %p161 = scmp.eq.s32.totalorder %s18, 0
      %p162 = por %p160, %p161
      %p163 = scmp.ne.s32.totalorder %s152, %s155
      %p164 = scmp.eq.s32.totalorder %s23, 1
      %p165 = por %p163, %p164
      %p166 = scmp.ne.s32.totalorder %s155, %s156
      %p167 = scmp.eq.s32.totalorder %s23, 0
      %p168 = por %p166, %p167
      %p169 = scmp.ne.s32.totalorder %s155, %s156
      %p170 = scmp.eq.s32.totalorder %s24, 1
      %p171 = por %p169, %p170
      %p173 = scmp.ne.s32.totalorder %s156, %s172
      %p174 = scmp.eq.s32.totalorder %s24, 0
      %p175 = por %p173, %p174
      %p176 = scmp.le.s32.totalorder 1, %s18
      %p177 = scmp.lt.s32.totalorder %s18, 3
      %p178 = pnand %p176, %p177
      %p179 = pneg %p178
      // Predicated region
      $region9: #{tpu_custom_call.1} parent=5 // pred_check
        _
      $region10: #{tpu_custom_call.1} parent=5 // pred_check_branch
        %181 = sbr.rel (%p178) target = $region12
      $region11: #{tpu_custom_call.1} parent=5 // pred_region
        %s182 = ssub.s32 %s18, 1
        // Predicated region
        $region13: #{tpu_custom_call.1} parent=11 // pred_check
          %p183 = pneg %p79
        $region14: #{tpu_custom_call.1} parent=11 // pred_check_branch
          %185 = sbr.rel (%p183) target = $region16
        $region15: #{tpu_custom_call.1} parent=11 // pred_region
          %s187 = ssub.s32 64, 64
          %188 = vsyncadd [#allocation6], %s187
          %s190 = sshll.u32 [#allocation5], 4
          %s191 = int_to_ptr.vmem [resolvable:$true] %s190
          %193 = dma.hbm_to_vmem [thread:$0]  %s1, 64, %s191, [#allocation6]
        $region16: #{tpu_custom_call.1} parent=11 // pred_fallthru
          _
        // Predicated region
        $region17: #{tpu_custom_call.1} parent=11 // pred_check
          %p194 = pneg %p100
        $region18: #{tpu_custom_call.1} parent=11 // pred_check_branch
          %196 = sbr.rel (%p194) target = $region20
        $region19: #{tpu_custom_call.1} parent=11 // pred_region
          _
        $region20: #{tpu_custom_call.1} parent=11 // pred_fallthru
          _
        // Predicated region
        $region21: #{tpu_custom_call.1} parent=11 // pred_check
          %p197 = pneg %p121
        $region22: #{tpu_custom_call.1} parent=11 // pred_check_branch
          %199 = sbr.rel (%p197) target = $region24
        $region23: #{tpu_custom_call.1} parent=11 // pred_region
          %s201 = ssub.s32 2048, 2048
          %202 = vsyncadd [#allocation6], %s201
          %s203 = sshll.u32 [#allocation7], 4
          %s204 = int_to_ptr.vmem [resolvable:$true] %s203
          %209 = dma.hbm_to_vmem [thread:$0]  %s3, 2048, %s204, [#allocation6], 128, 128, 8
        $region24: #{tpu_custom_call.1} parent=11 // pred_fallthru
          _
        // Predicated region
        $region25: #{tpu_custom_call.1} parent=11 // pred_check
          %p210 = pneg %p142
        $region26: #{tpu_custom_call.1} parent=11 // pred_check_branch
          %212 = sbr.rel (%p210) target = $region28
        $region27: #{tpu_custom_call.1} parent=11 // pred_region
          _
        $region28: #{tpu_custom_call.1} parent=11 // pred_fallthru
          _
      $region12: #{tpu_custom_call.1} parent=5 // pred_fallthru
        _
      %p213 = scmp.lt.s32.totalorder %s18, 2
      // Predicated region
      $region29: #{tpu_custom_call.1} parent=5 // pred_check
        %p214 = pneg %p213
      $region30: #{tpu_custom_call.1} parent=5 // pred_check_branch
        %216 = sbr.rel (%p214) target = $region32
      $region31: #{tpu_custom_call.1} parent=5 // pred_region
        // Predicated region
        $region33: #{tpu_custom_call.1} parent=31 // pred_check
          %p217 = pneg %p52
        $region34: #{tpu_custom_call.1} parent=31 // pred_check_branch
          %219 = sbr.rel (%p217) target = $region36
        $region35: #{tpu_custom_call.1} parent=31 // pred_region
          %s220 = sand.u32 %s42, 1
          %s221 = scalar_lea.sflag [#allocation3], %s220
          %s222 = sand.u32 %s42, 1
          %s223 = smul.addr %s222, 4
          %s224 = scalar_lea.vmem [#allocation2], %s223
          %s226 = ssub.s32 64, 64
          %227 = vsyncadd %s221, %s226
          %s228 = sadd.s32 %s26, %s25
          %s229 = smul.addr %s228, 64
          %s230 = scalar_lea.hbm %s0, %s229
          %s232 = sshll.u32 %s224, 4
          %s233 = int_to_ptr.vmem [resolvable:$true] %s232
          %235 = dma.hbm_to_vmem [thread:$0]  %s230, 64, %s233, %s221
        $region36: #{tpu_custom_call.1} parent=31 // pred_fallthru
          _
      $region32: #{tpu_custom_call.1} parent=5 // pred_fallthru
        _
      %p236 = scmp.le.s32.totalorder 1, %s18
      %p237 = scmp.lt.s32.totalorder %s18, 3
      %p238 = pnand %p236, %p237
      %p239 = pneg %p238
      // Predicated region
      $region37: #{tpu_custom_call.1} parent=5 // pred_check
        _
      $region38: #{tpu_custom_call.1} parent=5 // pred_check_branch
        %241 = sbr.rel (%p238) target = $region40
      $region39: #{tpu_custom_call.1} parent=5 // pred_region
        %s242 = ssub.s32 %s18, 1
        %s243 = sand.u32 %s45, 1
        %s244 = scalar_lea.sflag [#allocation3], %s243
        %s245 = sand.u32 %s45, 1
        %s246 = smul.addr %s245, 4
        %s247 = scalar_lea.vmem [#allocation2], %s246
        // Predicated region
        $region41: #{tpu_custom_call.1} parent=39 // pred_check
          %p248 = pneg %p58
        $region42: #{tpu_custom_call.1} parent=39 // pred_check_branch
          %250 = sbr.rel (%p248) target = $region44
        $region43: #{tpu_custom_call.1} parent=39 // pred_region
          %251 = dma.done %s244, 64
        $region44: #{tpu_custom_call.1} parent=39 // pred_fallthru
          _
        // Predicated region
        $region45: #{tpu_custom_call.1} parent=39 // pred_check
          %p252 = pneg %p79
        $region46: #{tpu_custom_call.1} parent=39 // pred_check_branch
          %254 = sbr.rel (%p252) target = $region48
        $region47: #{tpu_custom_call.1} parent=39 // pred_region
          %255 = dma.done [#allocation6], 64
        $region48: #{tpu_custom_call.1} parent=39 // pred_fallthru
          _
        // Predicated region
        $region49: #{tpu_custom_call.1} parent=39 // pred_check
          %p256 = pneg %p121
        $region50: #{tpu_custom_call.1} parent=39 // pred_check_branch
          %258 = sbr.rel (%p256) target = $region52
        $region51: #{tpu_custom_call.1} parent=39 // pred_region
          %259 = dma.done [#allocation6], 2048
        $region52: #{tpu_custom_call.1} parent=39 // pred_fallthru
          _
        %s260 = sand.u32 %s45, 1
        %s261 = scalar_lea.sflag [#allocation3], %s260
        %s262 = sand.u32 %s45, 1
        %s263 = smul.addr %s262, 4
        %s264 = scalar_lea.vmem [#allocation2], %s263
        %p265 = pneg %p58
        %p266 = pneg %p55
        %p267 = pneg %p79
        %p268 = pneg %p76
        %p269 = pneg %p100
        %p270 = pneg %p97
        %p271 = pneg %p121
        %p272 = pneg %p118
        %p273 = pneg %p142
        %p274 = pneg %p139
        %p275 = pneg %p168
        %p276 = pneg %p165
        %s277 = sand.u32 %s155, 1
        %s278 = scalar_lea.sflag [#allocation4], %s277
        %s279 = sand.u32 %s155, 1
        %s280 = smul.addr %s279, 16
        %s281 = scalar_lea.vmem [#allocation8], %s280
        %p283 = scmp.eq.s32.totalorder %s28, 0
        // Predicated region
        $region53: #{tpu_custom_call.1} parent=39 // pred_check
          %p284 = pneg %p283
        $region54: #{tpu_custom_call.1} parent=39 // pred_check_branch
          %286 = sbr.rel (%p284) target = $region56
        $region55: #{tpu_custom_call.1} parent=39 // pred_region
          %287 = vst [vmem:[%s281] sm:$0xff] 0.0
          %288 = vst [vmem:[%s281 + $0x8] sm:$0xff] 0.0
        $region56: #{tpu_custom_call.1} parent=39 // pred_fallthru
          _
        %v289 = vld [vmem:[%s247] sm:$0xf]
        %v290 = vld [vmem:[#allocation5] sm:$0xf]
        %v291 = vld [vmem:[%s2] sm:$0x1]
        %v293 = vlaneseq
        %v294 = vshrl.u32 %v293, 7
        %v295 = vsub.s32 0, %v294
        %v296 = vrot.slane %v291, %v295
        %vm298 = vcmask 64512
        %v300 = vsel %vm298, %v289, 0
        %vm302 = vcmask 1043456
        %v304 = vsel %vm302, %v290, 0
        %306 = vmatprep.subr.bf16.mxu0 0
        %307 = vmatpush1.bf16.msra.mxu0 0
        %308 = vmatprep.subr.bf16.mxu0 0
        %309 = vmatpush1.bf16.msra.mxu0 0
        %310 = vmatprep.subr.bf16.mxu0 0
        %311 = vmatpush1.bf16.msra.mxu0 0
        %312 = vmatprep.subr.bf16.mxu0 0
        %313 = vmatpush1.bf16.msra.mxu0 0
        %314 = vmatprep.subr.bf16.mxu0 0
        %315 = vmatpush1.bf16.msra.mxu0 0
        %316 = vmatprep.subr.bf16.mxu0 0
        %317 = vmatpush1.bf16.msra.mxu0 0
        %318 = vmatprep.subr.bf16.mxu0 0
        %319 = vmatpush1.bf16.msra.mxu0 0
        %320 = vmatprep.subr.bf16.mxu0 0
        %321 = vmatpush1.bf16.msra.mxu0 %v304
        %322 = vmatprep.subr.bf16.mxu0 0
        %323 = vmatpush2.bf16.msra.mxu0 0
        %324 = vmatprep.subr.bf16.mxu0 0
        %325 = vmatpush2.bf16.msra.mxu0 0
        %326 = vmatprep.subr.bf16.mxu0 0
        %327 = vmatpush2.bf16.msra.mxu0 0
        %328 = vmatprep.subr.bf16.mxu0 0
        %329 = vmatpush2.bf16.msra.mxu0 0
        %330 = vmatprep.subr.bf16.mxu0 0
        %331 = vmatpush2.bf16.msra.mxu0 0
        %332 = vmatprep.subr.bf16.mxu0 0
        %333 = vmatpush2.bf16.msra.mxu0 0
        %334 = vmatprep.subr.bf16.mxu0 0
        %335 = vmatpush2.bf16.msra.mxu0 0
        %336 = vmatprep.subr.bf16.mxu0 0
        %337 = vmatpush2.bf16.msra.mxu0 0
        %338 = vmatprep.mubr.bf16.mxu0 0
        %339 = vmatmul.mubr.bf16.gmra.mxu0 %v300
        %v340 = vpop.f32.mrf.mxu0
        %v341 = vadd.f32 %v296, %v340
        %v342 = vpop.f32.mrf.mxu0
        %v343 = vpop.f32.mrf.mxu0
        %v344 = vpop.f32.mrf.mxu0
        %345 = vdwg.mxu0
        %v346 = vmax.f32 %v341, 0.0
        %v347 = vpack.c.bf16 %v346, %v346
        %v348 = vld [vmem:[#allocation7] sm:$0xff]
        %v349 = vld [vmem:[#allocation7 + $0x8] sm:$0xff]
        %v350 = vld [vmem:[#allocation7 + $0x10] sm:$0xff]
        %v351 = vld [vmem:[#allocation7 + $0x18] sm:$0xff]
        %v352 = vld [vmem:[#allocation7 + $0x20] sm:$0xff]
        %v353 = vld [vmem:[#allocation7 + $0x28] sm:$0xff]
        %v354 = vld [vmem:[#allocation7 + $0x30] sm:$0xff]
        %v355 = vld [vmem:[#allocation7 + $0x38] sm:$0xff]
        %v356 = vld [vmem:[#allocation7 + $0x40] sm:$0xff]
        %v357 = vld [vmem:[#allocation7 + $0x48] sm:$0xff]
        %v358 = vld [vmem:[#allocation7 + $0x50] sm:$0xff]
        %v359 = vld [vmem:[#allocation7 + $0x58] sm:$0xff]
        %v360 = vld [vmem:[#allocation7 + $0x60] sm:$0xff]
        %v361 = vld [vmem:[#allocation7 + $0x68] sm:$0xff]
        %v362 = vld [vmem:[#allocation7 + $0x70] sm:$0xff]
        %v363 = vld [vmem:[#allocation7 + $0x78] sm:$0xff]
        %v364 = vld [vmem:[%s4] sm:$0x3]
        %v366 = vlaneseq
        %v367 = vshrl.u32 %v366, 7
        %v368 = vsub.s32 0, %v367
        %v369 = vrot.slane %v364, %v368
        %v370 = vlaneseq
        %v371 = vshrl.u32 %v370, 7
        %v372 = vsub.s32 1, %v371
        %v373 = vrot.slane %v364, %v372
        %v392 = vunpack.c.l.b16 %v348
        %v393 = vunpack.c.h.b16 %v348
        %v394 = vunpack.c.l.b16 %v349
        %v395 = vunpack.c.h.b16 %v349
        %v396 = vunpack.c.l.b16 %v350
        %v397 = vunpack.c.h.b16 %v350
        %v398 = vunpack.c.l.b16 %v351
        %v399 = vunpack.c.h.b16 %v351
        %v400 = vunpack.c.l.b16 %v352
        %v401 = vunpack.c.h.b16 %v352
        %v402 = vunpack.c.l.b16 %v353
        %v403 = vunpack.c.h.b16 %v353
        %v404 = vunpack.c.l.b16 %v354
        %v405 = vunpack.c.h.b16 %v354
        %v406 = vunpack.c.l.b16 %v355
        %v407 = vunpack.c.h.b16 %v355
        %v408 = vunpack.c.l.b16 %v356
        %v409 = vunpack.c.h.b16 %v356
        %v410 = vunpack.c.l.b16 %v357
        %v411 = vunpack.c.h.b16 %v357
        %v412 = vunpack.c.l.b16 %v358
        %v413 = vunpack.c.h.b16 %v358
        %v414 = vunpack.c.l.b16 %v359
        %v415 = vunpack.c.h.b16 %v359
        %v416 = vunpack.c.l.b16 %v360
        %v417 = vunpack.c.h.b16 %v360
        %v418 = vunpack.c.l.b16 %v361
        %v419 = vunpack.c.h.b16 %v361
        %v420 = vunpack.c.l.b16 %v362
        %v421 = vunpack.c.h.b16 %v362
        %v422 = vunpack.c.l.b16 %v363
        %v423 = vunpack.c.h.b16 %v363
        %v424 = vpack.c.b16 %v394, %v392
        %v425 = vpack.c.b16 %v395, %v393
        %v426 = vpack.c.b16 %v398, %v396
        %v427 = vpack.c.b16 %v399, %v397
        %v428 = vpack.c.b16 %v402, %v400
        %v429 = vpack.c.b16 %v403, %v401
        %v430 = vpack.c.b16 %v406, %v404
        %v431 = vpack.c.b16 %v407, %v405
        %v432 = vpack.c.b16 %v410, %v408
        %v433 = vpack.c.b16 %v411, %v409
        %v434 = vpack.c.b16 %v414, %v412
        %v435 = vpack.c.b16 %v415, %v413
        %v436 = vpack.c.b16 %v418, %v416
        %v437 = vpack.c.b16 %v419, %v417
        %v438 = vpack.c.b16 %v422, %v420
        %v439 = vpack.c.b16 %v423, %v421
        %456 = vmatprep.subr.bf16.mxu0 %v439
        %457 = vmatpush1.bf16.msra.mxu0 %v438
        %458 = vmatprep.subr.bf16.mxu0 %v437
        %459 = vmatpush1.bf16.msra.mxu0 %v436
        %460 = vmatprep.subr.bf16.mxu0 %v435
        %461 = vmatpush1.bf16.msra.mxu0 %v434
        %462 = vmatprep.subr.bf16.mxu0 %v433
        %463 = vmatpush1.bf16.msra.mxu0 %v432
        %464 = vmatprep.subr.bf16.mxu0 %v431
        %465 = vmatpush1.bf16.msra.mxu0 %v430
        %466 = vmatprep.subr.bf16.mxu0 %v429
        %467 = vmatpush1.bf16.msra.mxu0 %v428
        %468 = vmatprep.subr.bf16.mxu0 %v427
        %469 = vmatpush1.bf16.msra.mxu0 %v426
        %470 = vmatprep.subr.bf16.mxu0 %v425
        %471 = vmatpush1.bf16.msra.mxu0 %v424
        %472 = vmatprep.subr.bf16.mxu0 0
        %473 = vmatpush2.bf16.msra.mxu0 0
        %474 = vmatprep.subr.bf16.mxu0 0
        %475 = vmatpush2.bf16.msra.mxu0 0
        %476 = vmatprep.subr.bf16.mxu0 0
        %477 = vmatpush2.bf16.msra.mxu0 0
        %478 = vmatprep.subr.bf16.mxu0 0
        %479 = vmatpush2.bf16.msra.mxu0 0
        %480 = vmatprep.subr.bf16.mxu0 0
        %481 = vmatpush2.bf16.msra.mxu0 0
        %482 = vmatprep.subr.bf16.mxu0 0
        %483 = vmatpush2.bf16.msra.mxu0 0
        %484 = vmatprep.subr.bf16.mxu0 0
        %485 = vmatpush2.bf16.msra.mxu0 0
        %486 = vmatprep.subr.bf16.mxu0 0
        %487 = vmatpush2.bf16.msra.mxu0 0
        %488 = vmatprep.mubr.bf16.mxu0 0
        %489 = vmatmul.mubr.bf16.gmra.mxu0 %v347
        %v490 = vpop.f32.mrf.mxu0
        %v491 = vadd.f32 %v369, %v490
        %v492 = vpop.f32.mrf.mxu0
        %v493 = vadd.f32 %v373, %v492
        %v494 = vpop.f32.mrf.mxu0
        %v495 = vpop.f32.mrf.mxu0
        %496 = vdwg.mxu0
        %v497 = vmax.f32 %v491, 0.0
        %v498 = vmax.f32 %v493, 0.0
        %v499 = vld [vmem:[%s281] sm:$0xff]
        %v500 = vld [vmem:[%s281 + $0x8] sm:$0xff]
        %v501 = vadd.f32 %v497, 0.0
        %v502 = vadd.f32 %v498, 0.0
        %v503 = vadd.f32 %v499, %v501
        %v504 = vadd.f32 %v500, %v502
        %505 = vst [vmem:[%s281] sm:$0xff] %v503
        %506 = vst [vmem:[%s281 + $0x8] sm:$0xff] %v504
        %s507 = sand.u32 %s155, 1
        %s508 = scalar_lea.sflag [#allocation4], %s507
        %s509 = sand.u32 %s155, 1
        %s510 = smul.addr %s509, 16
        %s511 = scalar_lea.vmem [#allocation8], %s510
        // Predicated region
        $region57: #{tpu_custom_call.1} parent=39 // pred_check
          %p512 = pneg %p165
        $region58: #{tpu_custom_call.1} parent=39 // pred_check_branch
          %514 = sbr.rel (%p512) target = $region60
        $region59: #{tpu_custom_call.1} parent=39 // pred_region
          %s516 = ssub.s32 256, 256
          %517 = vsyncadd %s508, %s516
          %s518 = smul.addr %s27, 2
          %s519 = smul.addr %s518, 128
          %s520 = scalar_lea.hbm %s5, %s519
          %s522 = sshll.u32 %s511, 4
          %s523 = int_to_ptr.vmem [resolvable:$true] %s522
          %525 = dma.vmem_to_hbm [thread:$0]  %s523, 256, %s520, %s508
        $region60: #{tpu_custom_call.1} parent=39 // pred_fallthru
          _
      $region40: #{tpu_custom_call.1} parent=5 // pred_fallthru
        _
      %p526 = scmp.le.s32.totalorder 2, %s18
      // Predicated region
      $region61: #{tpu_custom_call.1} parent=5 // pred_check
        %p527 = pneg %p526
      $region62: #{tpu_custom_call.1} parent=5 // pred_check_branch
        %529 = sbr.rel (%p527) target = $region64
      $region63: #{tpu_custom_call.1} parent=5 // pred_region
        %s530 = ssub.s32 %s18, 2
        // Predicated region
        $region65: #{tpu_custom_call.1} parent=63 // pred_check
          %p531 = pneg %p171
        $region66: #{tpu_custom_call.1} parent=63 // pred_check_branch
          %533 = sbr.rel (%p531) target = $region68
        $region67: #{tpu_custom_call.1} parent=63 // pred_region
          %s534 = sand.u32 %s156, 1
          %s535 = scalar_lea.sflag [#allocation4], %s534
          %s536 = sand.u32 %s156, 1
          %s537 = smul.addr %s536, 16
          %s538 = scalar_lea.vmem [#allocation8], %s537
          %539 = dma.done %s535, 256
        $region68: #{tpu_custom_call.1} parent=63 // pred_fallthru
          _
      $region64: #{tpu_custom_call.1} parent=5 // pred_fallthru
        _
    $region6: #{tpu_custom_call.1} parent=1 // loop_footer
      %s22 = sadd.s32 1, %s18
    $region7: #{tpu_custom_call.1} parent=1 // loop_footer_branch
      %17 = sbr.rel target = $region3
    $region8: #{tpu_custom_call.1} parent=1 // loop_exit
      _
    %540 = vsyncpa [#allocation3], 1
    %s541 = scalar_lea.sflag [#allocation3], 1
    %542 = vsyncpa %s541, 1
    %543 = vsyncpa [#allocation6], 1
    %544 = vsyncpa [#allocation4], 1
    %s545 = scalar_lea.sflag [#allocation4], 1
    %546 = vsyncpa %s545, 1

</llo_original>
